<compile_context>
chip_gen: v7x
topology: tpu7x:2x2x1
jax: 0.10.0
libtpu: 0.0.40
codegen_flags: <defaults>
</compile_context>

<pallas_src>
import functools

import jax
import jax.numpy as jnp
from jax.experimental import pallas as pl
from jax.experimental.pallas import tpu as pltpu

OUT_PAD = 128  # lane-dense output width (sliced back down in the wrapper)


def gat_linear_kernel(x_ref, w_ref, a_ref, xw_ref, asrc_t_ref, adst_ref, *,
                      heads):
    """x @ W (MXU, bf16 inputs) + fused attention-logit projection xw @ A."""
    xw = jnp.dot(x_ref[...], w_ref[...],
                 preferred_element_type=jnp.float32)            # [N, H*C] f32
    xw_ref[...] = xw
    alpha = jnp.dot(xw, a_ref[...],
                    preferred_element_type=jnp.float32)         # [N, 2H] f32
    asrc_t_ref[...] = alpha[:, :heads].T                        # [H, N] (one small XLU transpose)
    adst_ref[...] = alpha[:, heads:]                            # [N, H]


def gat_attn_kernel(xw_ref, asrc_t_ref, adst_ref, bias_ref, adj_ref, out_ref, *,
                    heads, out_c, concat, activation):
    """Masked softmax attention + aggregation for one stripe of dst nodes."""
    # adj stripe: int8 [T, N]; nonzero where edge src->dst exists (incl. self loop).
    mask = adj_ref[...].astype(jnp.float32) > 0.0               # [T, N]

    a_src_t = asrc_t_ref[...]                                   # [H, N]
    a_dst_t = adst_ref[...].T                                   # [H, T]

    # e[h, t, j] = LeakyReLU(alpha_dst[t,h] + alpha_src[j,h], 0.2) for all heads at once.
    e = a_dst_t[:, :, None] + a_src_t[:, None, :]               # [H, T, N]
    e = jnp.where(e > 0, e, 0.2 * e)
    e = jnp.where(mask[None, :, :], e, jnp.float32(-1e30))

    # Softmax over source nodes.  Self loop guarantees a finite row max, so the
    # -1e30 entries underflow to exactly 0 after exp -> no post-exp re-mask.
    m = jnp.max(e, axis=-1, keepdims=True)                      # [H, T, 1]
    p = jnp.exp(e - m)
    denom = jnp.sum(p, axis=-1, keepdims=True)                  # [H, T, 1]
    att = (p * pl.reciprocal(denom, approx=True)).astype(jnp.bfloat16)  # [H, T, N]

    xw = xw_ref[...]                                            # [N, H*C] f32

    # Lane-padded output block; head results go straight into its slices
    # (no jnp.concatenate of sub-128-lane pieces).
    out_ref[...] = jnp.zeros_like(out_ref)
    if concat:
        for h in range(heads):
            xh = xw[:, h * out_c:(h + 1) * out_c].astype(jnp.bfloat16)   # [N, C]
            out_ref[:, h * out_c:(h + 1) * out_c] = jnp.dot(
                att[h], xh, preferred_element_type=jnp.float32)          # [T, C]
    else:
        acc = jnp.zeros((out_ref.shape[0], out_c), jnp.float32)
        for h in range(heads):
            xh = xw[:, h * out_c:(h + 1) * out_c].astype(jnp.bfloat16)
            acc = acc + jnp.dot(att[h], xh, preferred_element_type=jnp.float32)
        out_ref[:, :out_c] = acc / jnp.float32(heads)

    o = out_ref[...] + bias_ref[...]                            # bias zero-padded to OUT_PAD
    if activation:
        o = jnp.where(o > 0, o, jnp.expm1(o))                   # ELU(alpha=1.0)
    out_ref[...] = o


def gat_conv(x, adj, w, att_src, att_dst, bias, *, heads, out_c, concat,
             activation, tile_dst=None):
    """One GATConv layer = linear/logit kernel + dst-tiled attention kernel."""
    n, in_c = x.shape
    hc = heads * out_c
    out_dim = hc if concat else out_c

    if tile_dst is None:
        tile_dst = n if n <= 512 else 512
    assert n % tile_dst == 0, "toy driver keeps N divisible by the dst stripe"

    # Block-structured attention projection matrix A: [H*C, 2H].
    # Column h holds att_src[h] in rows h*C:(h+1)*C; column H+h holds att_dst[h].
    a_mat = jnp.zeros((hc, 2 * heads), jnp.float32)
    for h in range(heads):
        a_mat = a_mat.at[h * out_c:(h + 1) * out_c, h].set(att_src[h])
        a_mat = a_mat.at[h * out_c:(h + 1) * out_c, heads + h].set(att_dst[h])

    bias_pad = jnp.zeros((1, OUT_PAD), jnp.float32).at[:, :out_dim].set(bias)

    x_bf = x.astype(jnp.bfloat16)
    w_bf = w.astype(jnp.bfloat16)

    # --- Kernel 1: xw = x @ W and fused attention-logit projection. ---
    lin_kernel = functools.partial(gat_linear_kernel, heads=heads)
    xw, asrc_t, adst = pl.pallas_call(
        lin_kernel,
        out_shape=(jax.ShapeDtypeStruct((n, hc), jnp.float32),
                   jax.ShapeDtypeStruct((heads, n), jnp.float32),
                   jax.ShapeDtypeStruct((n, heads), jnp.float32)),
        grid=(1,),
        in_specs=[
            pl.BlockSpec((n, in_c), lambda i: (0, 0)),
            pl.BlockSpec((in_c, hc), lambda i: (0, 0)),
            pl.BlockSpec((hc, 2 * heads), lambda i: (0, 0)),
        ],
        out_specs=(
            pl.BlockSpec((n, hc), lambda i: (0, 0)),
            pl.BlockSpec((heads, n), lambda i: (0, 0)),
            pl.BlockSpec((n, heads), lambda i: (0, 0)),
        ),
        compiler_params=pltpu.CompilerParams(
            dimension_semantics=("arbitrary",)),
    )(x_bf, w_bf, a_mat)

    # --- Kernel 2: dst-tiled masked softmax attention + aggregation. ---
    grid = (n // tile_dst,)
    attn_kernel = functools.partial(gat_attn_kernel, heads=heads, out_c=out_c,
                                    concat=concat, activation=activation)
    out_full = pl.pallas_call(
        attn_kernel,
        out_shape=jax.ShapeDtypeStruct((n, OUT_PAD), jnp.float32),
        grid=grid,
        in_specs=[
            pl.BlockSpec((n, hc), lambda i: (0, 0)),            # xw (resident)
            pl.BlockSpec((heads, n), lambda i: (0, 0)),         # alpha_src^T (resident)
            pl.BlockSpec((tile_dst, heads), lambda i: (i, 0)),  # alpha_dst stripe
            pl.BlockSpec((1, OUT_PAD), lambda i: (0, 0)),       # bias (lane-padded)
            pl.BlockSpec((tile_dst, n), lambda i: (i, 0)),      # adj stripe (int8)
        ],
        out_specs=pl.BlockSpec((tile_dst, OUT_PAD), lambda i: (i, 0)),
        compiler_params=pltpu.CompilerParams(
            dimension_semantics=("parallel",)),                 # shard dst stripes across TCs
    )(xw, asrc_t, adst, bias_pad, adj)

    return out_full[:, :out_dim]


def gat_net(x, adj, params, *, heads, out_c, tile_dst=None):
    """GATNet.forward: x = elu(conv1(x)); return conv2(x)."""
    (w1, a_src1, a_dst1, b1, w2, a_src2, a_dst2, b2) = params
    h = gat_conv(x, adj, w1, a_src1, a_dst1, b1,
                 heads=heads, out_c=out_c, concat=True, activation=True,
                 tile_dst=tile_dst)
    out = gat_conv(h, adj, w2, a_src2, a_dst2, b2,
                   heads=1, out_c=out_c, concat=False, activation=False,
                   tile_dst=tile_dst)
    return out


if __name__ == "__main__":
    key = jax.random.PRNGKey(0)

    # Small synthetic "drug interaction" graph, deterministic.
    # TODO(synk): original spec reads DDICorpus2013.csv via pandas; replaced by
    # an in-script synthetic graph since no file/network access is allowed.
    num_nodes = 64
    in_c = num_nodes          # one-hot identity features (x = torch.eye(num_nodes))
    out_c = 8
    heads = 4
    tile_dst = 32             # dst-node stripe -> grid=(num_nodes // tile_dst,)

    src, dst = [], []
    for i in range(num_nodes):
        j = (i + 1) % num_nodes
        k = (i + 5) % num_nodes
        src += [i, j, i, k]
        dst += [j, i, k, i]
    edge_index = jnp.array([src, dst], dtype=jnp.int32)         # [2, E]

    x = jnp.eye(num_nodes, dtype=jnp.float32)                   # [N, N]

    # Dense int8 adjacency mask adj[dst, src] + self loops (PyG add_self_loops=True).
    adj = jnp.zeros((num_nodes, num_nodes), jnp.float32)
    adj = adj.at[edge_index[1], edge_index[0]].set(1.0)
    adj = jnp.maximum(adj, jnp.eye(num_nodes, dtype=jnp.float32))
    adj = adj.astype(jnp.int8)

    # Deterministic synthetic parameters (shapes from GATConv __init__).
    ks = jax.random.split(key, 6)
    scale = 0.1
    w1 = scale * jax.random.normal(ks[0], (in_c, heads * out_c), jnp.float32)
    a_src1 = scale * jax.random.normal(ks[1], (heads, out_c), jnp.float32)
    a_dst1 = scale * jax.random.normal(ks[2], (heads, out_c), jnp.float32)
    b1 = jnp.zeros((1, heads * out_c), jnp.float32)

    w2 = scale * jax.random.normal(ks[3], (heads * out_c, out_c), jnp.float32)
    a_src2 = scale * jax.random.normal(ks[4], (1, out_c), jnp.float32)
    a_dst2 = scale * jax.random.normal(ks[5], (1, out_c), jnp.float32)
    b2 = jnp.zeros((1, out_c), jnp.float32)

    params = (w1, a_src1, a_dst1, b1, w2, a_src2, a_dst2, b2)

    out = gat_net(x, adj, params, heads=heads, out_c=out_c, tile_dst=tile_dst)
    jax.block_until_ready(out)
    assert out.shape == (num_nodes, out_c)
    assert bool(jnp.all(jnp.isfinite(out)))
    print("KERNEL_OK")
</pallas_src>

<mosaic_0001>
module attributes {stable_mosaic.version = 11 : i64} {
  func.func @gat_linear_kernel(%arg0: i32, %arg1: memref<64x64xbf16, #tpu.memory_space<vmem>>, %arg2: memref<64x32xbf16, #tpu.memory_space<vmem>>, %arg3: memref<32x8xf32, #tpu.memory_space<vmem>>, %arg4: memref<64x32xf32, #tpu.memory_space<vmem>>, %arg5: memref<4x64xf32, #tpu.memory_space<vmem>>, %arg6: memref<64x4xf32, #tpu.memory_space<vmem>>) attributes {dimension_semantics = [#tpu.dimension_semantics<arbitrary>], iteration_bounds = array<i64: 1>, scalar_prefetch = 0 : i64, scratch_operands = 0 : i64, tpu.core_type = #tpu.core_type<tc>, window_params = [{pipeline_mode = #tpu.pipeline_mode<synchronous>, transform_indices = @transform_0, window_bounds = array<i64: 64, 64>}, {pipeline_mode = #tpu.pipeline_mode<synchronous>, transform_indices = @transform_1, window_bounds = array<i64: 64, 32>}, {pipeline_mode = #tpu.pipeline_mode<synchronous>, transform_indices = @transform_2, window_bounds = array<i64: 32, 8>}, {pipeline_mode = #tpu.pipeline_mode<synchronous>, transform_indices = @transform_3, window_bounds = array<i64: 64, 32>}, {pipeline_mode = #tpu.pipeline_mode<synchronous>, transform_indices = @transform_4, window_bounds = array<i64: 4, 64>}, {pipeline_mode = #tpu.pipeline_mode<synchronous>, transform_indices = @transform_5, window_bounds = array<i64: 64, 4>}]} {
    %c0 = arith.constant 0 : index
    %c0_0 = arith.constant 0 : index
    %0 = vector.load %arg1[%c0, %c0_0] : memref<64x64xbf16, #tpu.memory_space<vmem>>, vector<64x64xbf16>
    %c0_1 = arith.constant 0 : index
    %c0_2 = arith.constant 0 : index
    %1 = vector.load %arg2[%c0_1, %c0_2] : memref<64x32xbf16, #tpu.memory_space<vmem>>, vector<64x32xbf16>
    %cst = arith.constant dense<0.000000e+00> : vector<64x32xf32>
    %2 = tpu.matmul %0, %1, %cst {dimension_numbers = #tpu.dot_dimension_numbers<[1], [0], [0], [1], [0, 0, 1, 1], [], []>} : vector<64x64xbf16>, vector<64x32xbf16>, vector<64x32xf32> -> vector<64x32xf32>
    %c0_3 = arith.constant 0 : index
    %c0_4 = arith.constant 0 : index
    %3 = vector.load %arg4[%c0_3, %c0_4] : memref<64x32xf32, #tpu.memory_space<vmem>>, vector<64x32xf32>
    tpu.vector_store %arg4[%c0_3, %c0_4], %2 {strides = array<i32>} : memref<64x32xf32, #tpu.memory_space<vmem>>, vector<64x32xf32>,
    %c0_5 = arith.constant 0 : index
    %c0_6 = arith.constant 0 : index
    %4 = vector.load %arg3[%c0_5, %c0_6] : memref<32x8xf32, #tpu.memory_space<vmem>>, vector<32x8xf32>
    %cst_7 = arith.constant dense<0.000000e+00> : vector<64x8xf32>
    %5 = tpu.matmul %2, %4, %cst_7 {dimension_numbers = #tpu.dot_dimension_numbers<[1], [0], [0], [1], [0, 0, 1, 1], [], []>} : vector<64x32xf32>, vector<32x8xf32>, vector<64x8xf32> -> vector<64x8xf32>
    %6 = vector.extract_strided_slice %5 {offsets = [0, 0], sizes = [64, 4], strides = [1, 1]} : vector<64x8xf32> to vector<64x4xf32>
    %7 = tpu.transpose %6, [1, 0] : vector<64x4xf32> -> vector<4x64xf32>
    %c0_8 = arith.constant 0 : index
    %c0_9 = arith.constant 0 : index
    %8 = vector.load %arg5[%c0_8, %c0_9] : memref<4x64xf32, #tpu.memory_space<vmem>>, vector<4x64xf32>
    tpu.vector_store %arg5[%c0_8, %c0_9], %7 {strides = array<i32>} : memref<4x64xf32, #tpu.memory_space<vmem>>, vector<4x64xf32>,
    %9 = vector.extract_strided_slice %5 {offsets = [0, 4], sizes = [64, 4], strides = [1, 1]} : vector<64x8xf32> to vector<64x4xf32>
    %c0_10 = arith.constant 0 : index
    %c0_11 = arith.constant 0 : index
    %10 = vector.load %arg6[%c0_10, %c0_11] : memref<64x4xf32, #tpu.memory_space<vmem>>, vector<64x4xf32>
    tpu.vector_store %arg6[%c0_10, %c0_11], %9 {strides = array<i32>} : memref<64x4xf32, #tpu.memory_space<vmem>>, vector<64x4xf32>,
    return
  }
  func.func @transform_0(%arg0: i32) -> (i32, i32) {
    %c0_i32 = arith.constant 0 : i32
    %c0_i32_0 = arith.constant 0 : i32
    %c0_i32_1 = arith.constant 0 : i32
    return %c0_i32, %c0_i32_0 : i32, i32
  }
  func.func @transform_1(%arg0: i32) -> (i32, i32) {
    %c0_i32 = arith.constant 0 : i32
    %c0_i32_0 = arith.constant 0 : i32
    %c0_i32_1 = arith.constant 0 : i32
    return %c0_i32, %c0_i32_0 : i32, i32
  }
  func.func @transform_2(%arg0: i32) -> (i32, i32) {
    %c0_i32 = arith.constant 0 : i32
    %c0_i32_0 = arith.constant 0 : i32
    %c0_i32_1 = arith.constant 0 : i32
    return %c0_i32, %c0_i32_0 : i32, i32
  }
  func.func @transform_3(%arg0: i32) -> (i32, i32) {
    %c0_i32 = arith.constant 0 : i32
    %c0_i32_0 = arith.constant 0 : i32
    %c0_i32_1 = arith.constant 0 : i32
    return %c0_i32, %c0_i32_0 : i32, i32
  }
  func.func @transform_4(%arg0: i32) -> (i32, i32) {
    %c0_i32 = arith.constant 0 : i32
    %c0_i32_0 = arith.constant 0 : i32
    %c0_i32_1 = arith.constant 0 : i32
    return %c0_i32, %c0_i32_0 : i32, i32
  }
  func.func @transform_5(%arg0: i32) -> (i32, i32) {
    %c0_i32 = arith.constant 0 : i32
    %c0_i32_0 = arith.constant 0 : i32
    %c0_i32_1 = arith.constant 0 : i32
    return %c0_i32, %c0_i32_0 : i32, i32
  }
}

</mosaic_0001>

<llo_original>
// kernel: tpu_custom_call.1
$region0: #{tpu_custom_call.1}
  #allocation0 [shape = 'u32[]', space=smem, size = 0x4, offset = 0x4, fixed_abs, tag = 'smem constant byte address 0x4 - core index']
  #allocation1 [shape = 'u32[144,128]{1,0:T(1,128)}', space=vmem, size = 0x12000, scoped, tag = 'internal scratch']
  %s0 = inlined_call_operand.vmem [shape: bf16[64,64], index: 0, kind: input, shape index: {}]
  %s1 = inlined_call_operand.vmem [shape: bf16[64,32], index: 1, kind: input, shape index: {}]
  %s2 = inlined_call_operand.vmem [shape: f32[32,8], index: 2, kind: input, shape index: {}]
  %s3 = inlined_call_operand.vmem [shape: f32[64,32], index: 3, kind: output, shape index: {0}]
  %s4 = inlined_call_operand.hbm [shape: f32[4,64], index: 4, kind: output, shape index: {1}]
  %s5 = inlined_call_operand.vmem [shape: f32[64,4], index: 5, kind: output, shape index: {2}]
  %6 = xla_tuple %s3, %s4, %s5
  %s7 = sld [smem:[#allocation0]]
  $region38: #{tpu_custom_call.1} parent=0
    _
  %s9 = ssub.s32 1, %s7
  %s10 = scalar_select 0, %s9, %s7
  $region1: #{tpu_custom_call.1} parent=0
    #allocation2 [shape = 'u8[2048]{0}', space=vmem, size = 0x800, scoped, tag = 'output window, operand 1, single buffered']
    #allocation3 [shape = 's32[1]{0}', space=sflag, size = 0x4, scoped, tag = 'scoped memory for tpu_custom_call.1']
    %11 = vsyncpa [#allocation3], 0
    // Predicated region
    $region2: #{tpu_custom_call.1} parent=1 // pred_check
      _
    $region3: #{tpu_custom_call.1} parent=1 // pred_check_branch
      %13 = sbr.rel (0) target = $region5
    $region4: #{tpu_custom_call.1} parent=1 // pred_region
      _
    $region5: #{tpu_custom_call.1} parent=1 // pred_fallthru
      _
    // Predicated region
    $region6: #{tpu_custom_call.1} parent=1 // pred_check
      _
    $region7: #{tpu_custom_call.1} parent=1 // pred_check_branch
      %15 = sbr.rel (0) target = $region9
    $region8: #{tpu_custom_call.1} parent=1 // pred_region
      _
    $region9: #{tpu_custom_call.1} parent=1 // pred_fallthru
      _
    // Predicated region
    $region10: #{tpu_custom_call.1} parent=1 // pred_check
      _
    $region11: #{tpu_custom_call.1} parent=1 // pred_check_branch
      %17 = sbr.rel (0) target = $region13
    $region12: #{tpu_custom_call.1} parent=1 // pred_region
      _
    $region13: #{tpu_custom_call.1} parent=1 // pred_fallthru
      _
    %v19 = vld [vmem:[%s0] sm:$0xf]
    %v20 = vld [vmem:[%s0 + $0x4] sm:$0xf]
    %v21 = vld [vmem:[%s0 + $0x8] sm:$0xf]
    %v22 = vld [vmem:[%s0 + $0xc] sm:$0xf]
    %v23 = vld [vmem:[%s0 + $0x10] sm:$0xf]
    %v24 = vld [vmem:[%s0 + $0x14] sm:$0xf]
    %v25 = vld [vmem:[%s0 + $0x18] sm:$0xf]
    %v26 = vld [vmem:[%s0 + $0x1c] sm:$0xf]
    %v27 = vld [vmem:[%s1] sm:$0xf]
    %v28 = vld [vmem:[%s1 + $0x4] sm:$0xf]
    %v29 = vld [vmem:[%s1 + $0x8] sm:$0xf]
    %v30 = vld [vmem:[%s1 + $0xc] sm:$0xf]
    %v31 = vld [vmem:[%s1 + $0x10] sm:$0xf]
    %v32 = vld [vmem:[%s1 + $0x14] sm:$0xf]
    %v33 = vld [vmem:[%s1 + $0x18] sm:$0xf]
    %v34 = vld [vmem:[%s1 + $0x1c] sm:$0xf]
    %v43 = vunpack.c.l.b16 %v19
    %v44 = vunpack.c.l.b16 %v20
    %v45 = vunpack.c.l.b16 %v21
    %v46 = vunpack.c.l.b16 %v22
    %v47 = vunpack.c.l.b16 %v23
    %v48 = vunpack.c.l.b16 %v24
    %v49 = vunpack.c.l.b16 %v25
    %v50 = vunpack.c.l.b16 %v26
    %v51 = vpack.c.b16 %v44, %v43
    %v52 = vpack.c.b16 %v46, %v45
    %v53 = vpack.c.b16 %v48, %v47
    %v54 = vpack.c.b16 %v50, %v49
    %v63 = vunpack.c.l.b16 %v27
    %v64 = vunpack.c.l.b16 %v28
    %v65 = vunpack.c.l.b16 %v29
    %v66 = vunpack.c.l.b16 %v30
    %v67 = vunpack.c.l.b16 %v31
    %v68 = vunpack.c.l.b16 %v32
    %v69 = vunpack.c.l.b16 %v33
    %v70 = vunpack.c.l.b16 %v34
    %v71 = vpack.c.b16 %v64, %v63
    %v72 = vpack.c.b16 %v66, %v65
    %v73 = vpack.c.b16 %v68, %v67
    %v74 = vpack.c.b16 %v70, %v69
    %vm79 = vcmask 523264
    %v81 = vsel %vm79, %v51, 0
    %v84 = vsel %vm79, %v52, 0
    %v87 = vsel %vm79, %v53, 0
    %v90 = vsel %vm79, %v54, 0
    %92 = vmatprep.subr.bf16.mxu0 0
    %93 = vmatpush1.bf16.msra.mxu0 %v71
    %94 = vmatprep.subr.bf16.mxu0 0
    %95 = vmatpush1.bf16.msra.mxu0 %v72
    %96 = vmatprep.subr.bf16.mxu0 0
    %97 = vmatpush1.bf16.msra.mxu0 %v73
    %98 = vmatprep.subr.bf16.mxu0 0
    %99 = vmatpush1.bf16.msra.mxu0 %v74
    %100 = vmatprep.subr.bf16.mxu0 0
    %101 = vmatpush1.bf16.msra.mxu0 0
    %102 = vmatprep.subr.bf16.mxu0 0
    %103 = vmatpush1.bf16.msra.mxu0 0
    %104 = vmatprep.subr.bf16.mxu0 0
    %105 = vmatpush1.bf16.msra.mxu0 0
    %106 = vmatprep.subr.bf16.mxu0 0
    %107 = vmatpush1.bf16.msra.mxu0 0
    %108 = vmatprep.subr.bf16.mxu0 0
    %109 = vmatpush1.bf16.msra.mxu0 0
    %110 = vmatprep.subr.bf16.mxu0 0
    %111 = vmatpush1.bf16.msra.mxu0 0
    %112 = vmatprep.subr.bf16.mxu0 0
    %113 = vmatpush1.bf16.msra.mxu0 0
    %114 = vmatprep.subr.bf16.mxu0 0
    %115 = vmatpush1.bf16.msra.mxu0 0
    %116 = vmatprep.subr.bf16.mxu0 0
    %117 = vmatpush1.bf16.msra.mxu0 0
    %118 = vmatprep.subr.bf16.mxu0 0
    %119 = vmatpush1.bf16.msra.mxu0 0
    %120 = vmatprep.subr.bf16.mxu0 0
    %121 = vmatpush1.bf16.msra.mxu0 0
    %122 = vmatprep.subr.bf16.mxu0 0
    %123 = vmatpush1.bf16.msra.mxu0 0
    %124 = vmatprep.mubr.bf16.mxu0 0
    %125 = vmatmul.mubr.bf16.gmra.mrb[0].mxu0 %v81
    %v126 = vpop.f32.mrb[0].mxu0
    %v127 = vadd.f32 0.0, %v126
    %v128 = vpop.f32.mrb[0].mxu0
    %v129 = vpop.f32.mrb[0].mxu0
    %v130 = vadd.f32 0.0, %v129
    %v131 = vpop.f32.mrb[0].mxu0
    %132 = vmatprep.mubr.bf16.mxu0 0
    %133 = vmatmul.mubr.bf16.gmra.mrb[0].mxu0 %v84
    %v134 = vpop.f32.mrb[0].mxu0
    %v135 = vadd.f32 0.0, %v134
    %v136 = vpop.f32.mrb[0].mxu0
    %v137 = vpop.f32.mrb[0].mxu0
    %v138 = vadd.f32 0.0, %v137
    %v139 = vpop.f32.mrb[0].mxu0
    %140 = vmatprep.mubr.bf16.mxu0 0
    %141 = vmatmul.mubr.bf16.gmra.mrb[0].mxu0 %v87
    %v142 = vpop.f32.mrb[0].mxu0
    %v143 = vadd.f32 0.0, %v142
    %v144 = vpop.f32.mrb[0].mxu0
    %v145 = vpop.f32.mrb[0].mxu0
    %v146 = vadd.f32 0.0, %v145
    %v147 = vpop.f32.mrb[0].mxu0
    %148 = vmatprep.mubr.bf16.mxu0 0
    %149 = vmatmul.mubr.bf16.gmra.mrb[0].mxu0 %v90
    %v150 = vpop.f32.mrb[0].mxu0
    %v151 = vadd.f32 0.0, %v150
    %v152 = vpop.f32.mrb[0].mxu0
    %v153 = vpop.f32.mrb[0].mxu0
    %v154 = vadd.f32 0.0, %v153
    %v155 = vpop.f32.mrb[0].mxu0
    %156 = vdwg.mxu0
    %vm157 = vcmask 261120
    %158 = vst.msk [vmem:[%s3] sm:$0xff] %vm157, %v127
    %159 = vst.msk [vmem:[%s3 + $0x8] sm:$0xff] %vm157, %v130
    %160 = vst.msk [vmem:[%s3 + $0x10] sm:$0xff] %vm157, %v135
    %161 = vst.msk [vmem:[%s3 + $0x18] sm:$0xff] %vm157, %v138
    %162 = vst.msk [vmem:[%s3 + $0x20] sm:$0xff] %vm157, %v143
    %163 = vst.msk [vmem:[%s3 + $0x28] sm:$0xff] %vm157, %v146
    %164 = vst.msk [vmem:[%s3 + $0x30] sm:$0xff] %vm157, %v151
    %165 = vst.msk [vmem:[%s3 + $0x38] sm:$0xff] %vm157, %v154
    %v166 = vld [vmem:[%s2] sm:$0xff]
    %v167 = vld [vmem:[%s2 + $0x8] sm:$0xff]
    %v168 = vld [vmem:[%s2 + $0x10] sm:$0xff]
    %v169 = vld [vmem:[%s2 + $0x18] sm:$0xff]
    %v171 = vsel %vm157, %v127, 0
    %v174 = vsel %vm157, %v130, 0
    %v177 = vsel %vm157, %v135, 0
    %v180 = vsel %vm157, %v138, 0
    %v183 = vsel %vm157, %v143, 0
    %v186 = vsel %vm157, %v146, 0
    %v189 = vsel %vm157, %v151, 0
    %v192 = vsel %vm157, %v154, 0
    %194 = vmatprep.subr.mxu0 0.0
    %195 = vmatpush1.msra.mxu0 %v166
    %196 = vmatprep.subr.mxu0 0.0
    %197 = vmatpush1.msra.mxu0 %v167
    %198 = vmatprep.subr.mxu0 0.0
    %199 = vmatpush1.msra.mxu0 %v168
    %200 = vmatprep.subr.mxu0 0.0
    %201 = vmatpush1.msra.mxu0 %v169
    %202 = vmatprep.subr.mxu0 0.0
    %203 = vmatpush1.msra.mxu0 0.0
    %204 = vmatprep.subr.mxu0 0.0
    %205 = vmatpush1.msra.mxu0 0.0
    %206 = vmatprep.subr.mxu0 0.0
    %207 = vmatpush1.msra.mxu0 0.0
    %208 = vmatprep.subr.mxu0 0.0
    %209 = vmatpush1.msra.mxu0 0.0
    %210 = vmatprep.subr.mxu0 0.0
    %211 = vmatpush1.msra.mxu0 0.0
    %212 = vmatprep.subr.mxu0 0.0
    %213 = vmatpush1.msra.mxu0 0.0
    %214 = vmatprep.subr.mxu0 0.0
    %215 = vmatpush1.msra.mxu0 0.0
    %216 = vmatprep.subr.mxu0 0.0
    %217 = vmatpush1.msra.mxu0 0.0
    %218 = vmatprep.subr.mxu0 0.0
    %219 = vmatpush1.msra.mxu0 0.0
    %220 = vmatprep.subr.mxu0 0.0
    %221 = vmatpush1.msra.mxu0 0.0
    %222 = vmatprep.subr.mxu0 0.0
    %223 = vmatpush1.msra.mxu0 0.0
    %224 = vmatprep.subr.mxu0 0.0
    %225 = vmatpush1.msra.mxu0 0.0
    %226 = vmatprep.subr.mxu0 0.0
    %227 = vmatpush1.msra.mxu0 0.0
    %228 = vmatprep.subr.mxu0 0.0
    %229 = vmatpush1.msra.mxu0 0.0
    %230 = vmatprep.subr.mxu0 0.0
    %231 = vmatpush1.msra.mxu0 0.0
    %232 = vmatprep.subr.mxu0 0.0
    %233 = vmatpush1.msra.mxu0 0.0
    %234 = vmatprep.subr.mxu0 0.0
    %235 = vmatpush1.msra.mxu0 0.0
    %236 = vmatprep.subr.mxu0 0.0
    %237 = vmatpush1.msra.mxu0 0.0
    %238 = vmatprep.subr.mxu0 0.0
    %239 = vmatpush1.msra.mxu0 0.0
    %240 = vmatprep.subr.mxu0 0.0
    %241 = vmatpush1.msra.mxu0 0.0
    %242 = vmatprep.subr.mxu0 0.0
    %243 = vmatpush1.msra.mxu0 0.0
    %244 = vmatprep.subr.mxu0 0.0
    %245 = vmatpush1.msra.mxu0 0.0
    %246 = vmatprep.subr.mxu0 0.0
    %247 = vmatpush1.msra.mxu0 0.0
    %248 = vmatprep.subr.mxu0 0.0
    %249 = vmatpush1.msra.mxu0 0.0
    %250 = vmatprep.subr.mxu0 0.0
    %251 = vmatpush1.msra.mxu0 0.0
    %252 = vmatprep.subr.mxu0 0.0
    %253 = vmatpush1.msra.mxu0 0.0
    %254 = vmatprep.subr.mxu0 0.0
    %255 = vmatpush1.msra.mxu0 0.0
    %256 = vmatprep.subr.mxu0 0.0
    %257 = vmatpush1.msra.mxu0 0.0
    %258 = vmatprep.mubr.f32.mxu0 0.0
    %259 = vmatmul.mubr.f32.gmra.mrb[0].mxu0 %v171
    %v260 = vpop.f32.mrb[0].mxu0
    %v261 = vadd.f32 0.0, %v260
    %v262 = vpop.f32.mrb[0].mxu0
    %263 = vmatprep.mubr.f32.mxu0 0.0
    %264 = vmatmul.mubr.f32.gmra.mrb[0].mxu0 %v174
    %v265 = vpop.f32.mrb[0].mxu0
    %v266 = vadd.f32 0.0, %v265
    %v267 = vpop.f32.mrb[0].mxu0
    %268 = vmatprep.mubr.f32.mxu0 0.0
    %269 = vmatmul.mubr.f32.gmra.mrb[0].mxu0 %v177
    %v270 = vpop.f32.mrb[0].mxu0
    %v271 = vadd.f32 0.0, %v270
    %v272 = vpop.f32.mrb[0].mxu0
    %273 = vmatprep.mubr.f32.mxu0 0.0
    %274 = vmatmul.mubr.f32.gmra.mrb[0].mxu0 %v180
    %v275 = vpop.f32.mrb[0].mxu0
    %v276 = vadd.f32 0.0, %v275
    %v277 = vpop.f32.mrb[0].mxu0
    %278 = vmatprep.mubr.f32.mxu0 0.0
    %279 = vmatmul.mubr.f32.gmra.mrb[0].mxu0 %v183
    %v280 = vpop.f32.mrb[0].mxu0
    %v281 = vadd.f32 0.0, %v280
    %v282 = vpop.f32.mrb[0].mxu0
    %283 = vmatprep.mubr.f32.mxu0 0.0
    %284 = vmatmul.mubr.f32.gmra.mrb[0].mxu0 %v186
    %v285 = vpop.f32.mrb[0].mxu0
    %v286 = vadd.f32 0.0, %v285
    %v287 = vpop.f32.mrb[0].mxu0
    %288 = vmatprep.mubr.f32.mxu0 0.0
    %289 = vmatmul.mubr.f32.gmra.mrb[0].mxu0 %v189
    %v290 = vpop.f32.mrb[0].mxu0
    %v291 = vadd.f32 0.0, %v290
    %v292 = vpop.f32.mrb[0].mxu0
    %293 = vmatprep.mubr.f32.mxu0 0.0
    %294 = vmatmul.mubr.f32.gmra.mrb[0].mxu0 %v192
    %v295 = vpop.f32.mrb[0].mxu0
    %v296 = vadd.f32 0.0, %v295
    %v297 = vpop.f32.mrb[0].mxu0
    %298 = vdwg.mxu0
    %299 = vxpose.xlu0.b32.start [1/16] %v261, 128
    %300 = vxpose.xlu0.b32.cont [2/16] %v266, 128
    %301 = vxpose.xlu0.b32.cont [3/16] %v271, 128
    %302 = vxpose.xlu0.b32.cont [4/16] %v276, 128
    %303 = vxpose.xlu0.b32.cont [5/16] %v281, 128
    %304 = vxpose.xlu0.b32.cont [6/16] %v286, 128
    %305 = vxpose.xlu0.b32.cont [7/16] %v291, 128
    %306 = vxpose.xlu0.b32.cont [8/16] %v296, 128
    %307 = vxpose.xlu0.b32.cont [9/16] 0.0, 128
    %308 = vxpose.xlu0.b32.cont [10/16] 0.0, 128
    %309 = vxpose.xlu0.b32.cont [11/16] 0.0, 128
    %310 = vxpose.xlu0.b32.cont [12/16] 0.0, 128
    %311 = vxpose.xlu0.b32.cont [13/16] 0.0, 128
    %312 = vxpose.xlu0.b32.cont [14/16] 0.0, 128
    %313 = vxpose.xlu0.b32.cont [15/16] 0.0, 128
    %314 = vxpose.xlu0.b32.end [16/16] 0.0, 128
    %v315 = vpop.trf.xlu0
    %v316 = vpop.trf.xlu0
    %v317 = vpop.trf.xlu0
    %v318 = vpop.trf.xlu0
    %v319 = vpop.trf.xlu0
    %v320 = vpop.trf.xlu0
    %v321 = vpop.trf.xlu0
    %v322 = vpop.trf.xlu0
    %v323 = vpop.trf.xlu0
    %v324 = vpop.trf.xlu0
    %v325 = vpop.trf.xlu0
    %v326 = vpop.trf.xlu0
    %v327 = vpop.trf.xlu0
    %v328 = vpop.trf.xlu0
    %v329 = vpop.trf.xlu0
    %v330 = vpop.trf.xlu0
    %vm331 = vcmask 519168
    %332 = vst.msk [vmem:[#allocation2] sm:$0xf] %vm331, %v315
    %341 = vrot.lane.b32.xlu0 %v261, 124
    %v342 = vpop.permute.xlu0 %341
    %343 = vrot.lane.b32.xlu0 %v266, 124
    %v344 = vpop.permute.xlu0 %343
    %345 = vrot.lane.b32.xlu0 %v271, 124
    %v346 = vpop.permute.xlu0 %345
    %347 = vrot.lane.b32.xlu0 %v276, 124
    %v348 = vpop.permute.xlu0 %347
    %349 = vrot.lane.b32.xlu0 %v281, 124
    %v350 = vpop.permute.xlu0 %349
    %351 = vrot.lane.b32.xlu0 %v286, 124
    %v352 = vpop.permute.xlu0 %351
    %353 = vrot.lane.b32.xlu0 %v291, 124
    %v354 = vpop.permute.xlu0 %353
    %355 = vrot.lane.b32.xlu0 %v296, 124
    %v356 = vpop.permute.xlu0 %355
    %vm365 = vcmask 31744
    %366 = vst.msk [vmem:[%s5] sm:$0xff] %vm365, %v342
    %367 = vst.msk [vmem:[%s5 + $0x8] sm:$0xff] %vm365, %v344
    %368 = vst.msk [vmem:[%s5 + $0x10] sm:$0xff] %vm365, %v346
    %369 = vst.msk [vmem:[%s5 + $0x18] sm:$0xff] %vm365, %v348
    %370 = vst.msk [vmem:[%s5 + $0x20] sm:$0xff] %vm365, %v350
    %371 = vst.msk [vmem:[%s5 + $0x28] sm:$0xff] %vm365, %v352
    %372 = vst.msk [vmem:[%s5 + $0x30] sm:$0xff] %vm365, %v354
    %373 = vst.msk [vmem:[%s5 + $0x38] sm:$0xff] %vm365, %v356
    // Predicated region
    $region14: #{tpu_custom_call.1} parent=1 // pred_check
      _
    $region15: #{tpu_custom_call.1} parent=1 // pred_check_branch
      %375 = sbr.rel (0) target = $region17
    $region16: #{tpu_custom_call.1} parent=1 // pred_region
      _
    $region17: #{tpu_custom_call.1} parent=1 // pred_fallthru
      _
    // Predicated region
    $region18: #{tpu_custom_call.1} parent=1 // pred_check
      _
    $region19: #{tpu_custom_call.1} parent=1 // pred_check_branch
      %377 = sbr.rel (0) target = $region21
    $region20: #{tpu_custom_call.1} parent=1 // pred_region
      %s379 = ssub.s32 64, 64
      %380 = vsyncadd [#allocation3], %s379
      %s382 = sshll.u32 [#allocation2], 4
      %s383 = int_to_ptr.vmem [resolvable:$true] %s382
      %385 = dma.vmem_to_hbm [thread:$0]  %s383, 64, %s4, [#allocation3]
    $region21: #{tpu_custom_call.1} parent=1 // pred_fallthru
      _
    // Predicated region
    $region22: #{tpu_custom_call.1} parent=1 // pred_check
      _
    $region23: #{tpu_custom_call.1} parent=1 // pred_check_branch
      %387 = sbr.rel (0) target = $region25
    $region24: #{tpu_custom_call.1} parent=1 // pred_region
      _
    $region25: #{tpu_custom_call.1} parent=1 // pred_fallthru
      _
    // Predicated region
    $region26: #{tpu_custom_call.1} parent=1 // pred_check
      _
    $region27: #{tpu_custom_call.1} parent=1 // pred_check_branch
      %389 = sbr.rel (0) target = $region29
    $region28: #{tpu_custom_call.1} parent=1 // pred_region
      _
    $region29: #{tpu_custom_call.1} parent=1 // pred_fallthru
      _
    // Predicated region
    $region30: #{tpu_custom_call.1} parent=1 // pred_check
      _
    $region31: #{tpu_custom_call.1} parent=1 // pred_check_branch
      %391 = sbr.rel (0) target = $region33
    $region32: #{tpu_custom_call.1} parent=1 // pred_region
      %392 = dma.done [#allocation3], 64
    $region33: #{tpu_custom_call.1} parent=1 // pred_fallthru
      _
    // Predicated region
    $region34: #{tpu_custom_call.1} parent=1 // pred_check
      _
    $region35: #{tpu_custom_call.1} parent=1 // pred_check_branch
      %394 = sbr.rel (0) target = $region37
    $region36: #{tpu_custom_call.1} parent=1 // pred_region
      _
    $region37: #{tpu_custom_call.1} parent=1 // pred_fallthru
      _
    %395 = vsyncpa [#allocation3], 1

</llo_original>
